<compile_context>
chip_gen: v5e
topology: v5e:2x2
jax: 0.10.0
libtpu: 0.0.40
codegen_flags: <defaults>
</compile_context>

<pallas_src>
import functools

import jax
import jax.numpy as jnp
from jax.experimental import pallas as pl
from jax.experimental.pallas import tpu as pltpu


def _round_up(x, m):
    return ((x + m - 1) // m) * m


def _vmem_budget_bytes():
    """Generation-aware VMEM budget with headroom for compiler scratch."""
    cap = 128 * 1024 * 1024
    try:
        info_cap = int(pltpu.get_tpu_info().vmem_capacity_bytes)
        if info_cap > 0:
            cap = info_cap
    except Exception:
        pass
    # ~110 MiB on 128-MiB parts (v5e/v6e), ~55 MiB on 64-MiB parts (v7x).
    return min(int(cap * 0.82), cap - (8 << 20))


def _pick_row_tile(M, tm_max):
    """Row tile: multiple of 8, <= tm_max, balanced so padding is minimal
    (zero whenever M is a multiple of 8 and tiles evenly)."""
    cap = max(8, (min(tm_max, _round_up(M, 8)) // 8) * 8)
    n_tiles = -(-M // cap)
    tm_eff = _round_up(-(-M // n_tiles), 8)
    return tm_eff, _round_up(M, tm_eff)


# ---------------------------------------------------------------------------
# Kernels
# ---------------------------------------------------------------------------
def _mm_bias_kernel(x_ref, w_ref, b_ref, o_ref, *, compute_dtype):
    # In-kernel cast of the activation tile (free on the VPU under MXU/DMA).
    x = x_ref[...].astype(compute_dtype)
    acc = jnp.dot(x, w_ref[...], preferred_element_type=jnp.float32)
    o_ref[...] = (acc + b_ref[...]).astype(o_ref.dtype)


def _mm_bias_ksplit_kernel(x_ref, w_ref, b_ref, o_ref, acc_ref, *, compute_dtype):
    k = pl.program_id(2)

    @pl.when(k == 0)
    def _():
        acc_ref[...] = jnp.zeros_like(acc_ref)

    x = x_ref[...].astype(compute_dtype)
    acc_ref[...] += jnp.dot(x, w_ref[...], preferred_element_type=jnp.float32)

    @pl.when(k == pl.num_programs(2) - 1)
    def _():
        o_ref[...] = (acc_ref[...] + b_ref[...]).astype(o_ref.dtype)


# ---------------------------------------------------------------------------
# Wrapper
# ---------------------------------------------------------------------------
def output_layer_forward(x, weight, bias, *, use_bn=False, eps=1e-5,
                         tm=512, tn=None, tk=None, compute_dtype=None):
    """x: [B, T, in_dim]; weight: [out_dim, in_dim]; bias: [out_dim].

    tn / tk are optional overrides (rounded to 128) mainly for testing the
    N-tiled and K-split paths; by default they are chosen automatically.
    """
    B, T, K = x.shape
    N = weight.shape[0]
    M = B * T
    out_dtype = x.dtype
    if compute_dtype is None:
        # bf16 MXU operands with f32 accumulation halve the dominant HBM streams.
        compute_dtype = jnp.bfloat16 if x.dtype == jnp.float32 else x.dtype

    x2d = x.reshape(M, K)

    # ---- Fold BatchNorm (training-mode stats, affine=False) into the Linear.
    w_t = weight.astype(jnp.float32).T                 # [K, N]
    b_row = bias.astype(jnp.float32).reshape(1, N)     # [1, N]
    if use_bn:
        xf = x2d.astype(jnp.float32)
        mean = jnp.mean(xf, axis=0)                                   # [K]
        # Centered (two-pass) biased variance: no catastrophic cancellation.
        var = jnp.mean(jnp.square(xf - mean[None, :]), axis=0)        # [K]
        invstd = jax.lax.rsqrt(var + eps)
        #  ((x - mu) * s) @ W^T + b  =  x @ (s[:,None] * W^T) + (b - mu @ (s[:,None] * W^T))
        w_t = w_t * invstd[:, None]
        b_row = b_row - jnp.dot(mean[None, :], w_t)

    itemsize_x = jnp.dtype(x.dtype).itemsize
    itemsize_c = jnp.dtype(compute_dtype).itemsize
    itemsize_o = jnp.dtype(out_dtype).itemsize
    vmem_budget = _vmem_budget_bytes()

    # ---- N tiling ----------------------------------------------------------
    if tn is not None:
        tn_eff = max(128, _round_up(tn, 128))
        N_pad = _round_up(N, tn_eff)
    else:
        N_pad = _round_up(N, 128)
        if 2 * K * N_pad * itemsize_c + 2 * N_pad * 4 <= vmem_budget // 3:
            tn_eff = N_pad                                # weight-stationary
        else:
            tn_eff = next(d for d in (512, 256, 128) if N_pad % d == 0)

    # ---- K tiling (split only when a full-K tile cannot fit) ---------------
    def _rows_fitting(k_cols, n_cols, acc=False):
        fixed = 2 * k_cols * n_cols * itemsize_c + 2 * n_cols * 4
        per_row = 2 * (k_cols * itemsize_x + n_cols * itemsize_o)
        if acc:
            per_row += n_cols * 4                         # f32 accumulator scratch
        return max(0, (vmem_budget - fixed) // per_row)

    if tk is not None:
        tk_eff = min(max(128, _round_up(tk, 128)), _round_up(K, 128))
        k_split = tk_eff < K
    else:
        tk_eff = K
        k_split = False
        if _rows_fitting(K, tn_eff) < 8:
            k_split = True
            tk_eff = 512
            while tk_eff > 128 and _rows_fitting(tk_eff, tn_eff, acc=True) < 128:
                tk_eff //= 2

    if k_split:
        K_pad = _round_up(K, tk_eff)
        rows = _rows_fitting(tk_eff, tn_eff, acc=True)
    else:
        K_pad = K                                         # no K padding needed
        rows = _rows_fitting(K, tn_eff)

    tm_cap = max(8, min(tm, (rows // 8) * 8))
    tm_eff, M_pad = _pick_row_tile(M, tm_cap)

    # ---- Pad only what is actually needed ----------------------------------
    pad_m, pad_k, pad_n = M_pad - M, K_pad - K, N_pad - N
    x_in = x2d if (pad_m == 0 and pad_k == 0) else jnp.pad(x2d, ((0, pad_m), (0, pad_k)))
    w_in = w_t if (pad_k == 0 and pad_n == 0) else jnp.pad(w_t, ((0, pad_k), (0, pad_n)))
    w_in = w_in.astype(compute_dtype)
    b_in = b_row if pad_n == 0 else jnp.pad(b_row, ((0, 0), (0, pad_n)))   # f32

    grid_m = M_pad // tm_eff
    grid_n = N_pad // tn_eff

    if not k_split:
        grid = (grid_m, grid_n)
        kernel = functools.partial(_mm_bias_kernel, compute_dtype=compute_dtype)
        in_specs = [
            pl.BlockSpec((tm_eff, K_pad), lambda i, j: (i, 0)),   # activations (full K)
            pl.BlockSpec((K_pad, tn_eff), lambda i, j: (0, j)),   # folded weight
            pl.BlockSpec((1, tn_eff), lambda i, j: (0, j)),       # folded bias (f32)
        ]
        out_spec = pl.BlockSpec((tm_eff, tn_eff), lambda i, j: (i, j))
        scratch = []
        semantics = ("parallel", "arbitrary")
    else:
        grid_k = K_pad // tk_eff
        grid = (grid_m, grid_n, grid_k)
        kernel = functools.partial(_mm_bias_ksplit_kernel, compute_dtype=compute_dtype)
        in_specs = [
            pl.BlockSpec((tm_eff, tk_eff), lambda i, j, k: (i, k)),
            pl.BlockSpec((tk_eff, tn_eff), lambda i, j, k: (k, j)),
            pl.BlockSpec((1, tn_eff), lambda i, j, k: (0, j)),
        ]
        out_spec = pl.BlockSpec((tm_eff, tn_eff), lambda i, j, k: (i, j))
        scratch = [pltpu.VMEM((tm_eff, tn_eff), jnp.float32)]
        semantics = ("parallel", "arbitrary", "arbitrary")

    # Real HBM traffic: weight slab re-streamed once per row-tile unless stationary.
    weight_streams = 1 if (grid_n == 1 and not k_split) else grid_m
    cost = pl.CostEstimate(
        flops=2 * M_pad * K_pad * N_pad,
        transcendentals=0,
        bytes_accessed=int(M_pad * K_pad * itemsize_x
                           + weight_streams * K_pad * N_pad * itemsize_c
                           + N_pad * 4
                           + M_pad * N_pad * itemsize_o),
    )

    out_padded = pl.pallas_call(
        kernel,
        out_shape=jax.ShapeDtypeStruct((M_pad, N_pad), out_dtype),
        grid_spec=pltpu.PrefetchScalarGridSpec(
            num_scalar_prefetch=0,
            grid=grid,
            in_specs=in_specs,
            out_specs=out_spec,
            scratch_shapes=scratch,
        ),
        compiler_params=pltpu.CompilerParams(
            dimension_semantics=semantics,
            vmem_limit_bytes=int(vmem_budget),
        ),
        cost_estimate=cost,
    )(x_in, w_in, b_in)

    out = out_padded if (pad_m == 0 and pad_n == 0) else out_padded[:M, :N]
    return out.reshape(B, T, N)


# ---------------------------------------------------------------------------
# Pure-JAX reference
# ---------------------------------------------------------------------------
def _reference(x, weight, bias, *, use_bn=False, eps=1e-5):
    B, T, K = x.shape
    x2d = x.reshape(B * T, K).astype(jnp.float32)
    if use_bn:
        mu = jnp.mean(x2d, axis=0, keepdims=True)
        var = jnp.mean((x2d - mu) ** 2, axis=0, keepdims=True)
        x2d = (x2d - mu) / jnp.sqrt(var + eps)
    out = x2d @ weight.astype(jnp.float32).T + bias.astype(jnp.float32)
    return out.reshape(B, T, -1).astype(x.dtype)


if __name__ == "__main__":
    B, T, in_dim, out_dim = 2, 8, 32, 16

    key = jax.random.PRNGKey(0)
    kx, kw, kb = jax.random.split(key, 3)

    x = jax.random.normal(kx, (B, T, in_dim), dtype=jnp.float32)
    bound = 1.0 / (in_dim ** 0.5)
    weight = jax.random.uniform(kw, (out_dim, in_dim), jnp.float32, -bound, bound)
    bias = jax.random.uniform(kb, (out_dim,), jnp.float32, -bound, bound)

    # f32 MXU path (weight-stationary auto-tiling): tight tolerance.
    for use_bn in (False, True):
        out = output_layer_forward(x, weight, bias, use_bn=use_bn,
                                   compute_dtype=jnp.float32)
        jax.block_until_ready(out)
        ref = _reference(x, weight, bias, use_bn=use_bn)
        assert out.shape == (B, T, out_dim)
        assert jnp.allclose(out, ref, atol=1e-4, rtol=1e-4), f"mismatch use_bn={use_bn}"

    # Default path: bf16 MXU operands, f32 accumulation -> looser tolerance.
    out_bf = output_layer_forward(x, weight, bias, use_bn=True)
    jax.block_until_ready(out_bf)
    ref_bn = _reference(x, weight, bias, use_bn=True)
    assert jnp.allclose(out_bf, ref_bn, atol=5e-2, rtol=5e-2), "bf16 path mismatch"

    # Exercise the N-tiled (2-D grid) and K-split (3-D grid + accumulator) paths.
    B2, T2, K2, N2 = 2, 64, 256, 384
    x2 = jax.random.normal(kx, (B2, T2, K2), dtype=jnp.float32)
    w2 = jax.random.uniform(kw, (N2, K2), jnp.float32, -0.05, 0.05)
    b2 = jax.random.uniform(kb, (N2,), jnp.float32, -0.05, 0.05)
    ref2 = _reference(x2, w2, b2, use_bn=True)
    out_nt = output_layer_forward(x2, w2, b2, use_bn=True, tn=128,
                                  compute_dtype=jnp.float32)
    out_ks = output_layer_forward(x2, w2, b2, use_bn=True, tn=128, tk=128,
                                  compute_dtype=jnp.float32)
    jax.block_until_ready((out_nt, out_ks))
    assert jnp.allclose(out_nt, ref2, atol=1e-3, rtol=1e-3), "N-tiled path mismatch"
    assert jnp.allclose(out_ks, ref2, atol=1e-3, rtol=1e-3), "K-split path mismatch"

    print("KERNEL_OK")
</pallas_src>

<mosaic_0001>
module attributes {stable_mosaic.version = 11 : i64} {
  func.func @_mm_bias_kernel(%arg0: i32, %arg1: i32, %arg2: memref<16x32xf32, #tpu.memory_space<vmem>>, %arg3: memref<32x128xf32, #tpu.memory_space<vmem>>, %arg4: memref<1x128xf32, #tpu.memory_space<vmem>>, %arg5: memref<16x128xf32, #tpu.memory_space<vmem>>) attributes {dimension_semantics = [#tpu.dimension_semantics<parallel>, #tpu.dimension_semantics<arbitrary>], iteration_bounds = array<i64: 1, 1>, scalar_prefetch = 0 : i64, scratch_operands = 0 : i64, tpu.core_type = #tpu.core_type<tc>, window_params = [{transform_indices = @transform_0, window_bounds = array<i64: 16, 32>}, {transform_indices = @transform_1, window_bounds = array<i64: 32, 128>}, {transform_indices = @transform_2, window_bounds = array<i64: 1, 128>}, {transform_indices = @transform_3, window_bounds = array<i64: 16, 128>}]} {
    %c0 = arith.constant 0 : index
    %c0_0 = arith.constant 0 : index
    %0 = vector.load %arg2[%c0, %c0_0] : memref<16x32xf32, #tpu.memory_space<vmem>>, vector<16x32xf32>
    %c0_1 = arith.constant 0 : index
    %c0_2 = arith.constant 0 : index
    %1 = vector.load %arg3[%c0_1, %c0_2] : memref<32x128xf32, #tpu.memory_space<vmem>>, vector<32x128xf32>
    %cst = arith.constant dense<0.000000e+00> : vector<16x128xf32>
    %2 = tpu.matmul %0, %1, %cst {dimension_numbers = #tpu.dot_dimension_numbers<[1], [0], [0], [1], [0, 0, 1, 1], [], []>} : vector<16x32xf32>, vector<32x128xf32>, vector<16x128xf32> -> vector<16x128xf32>
    %c0_3 = arith.constant 0 : index
    %c0_4 = arith.constant 0 : index
    %3 = vector.load %arg4[%c0_3, %c0_4] : memref<1x128xf32, #tpu.memory_space<vmem>>, vector<1x128xf32>
    %4 = vector.broadcast %3 : vector<1x128xf32> to vector<16x128xf32>
    %5 = arith.addf %2, %4 : vector<16x128xf32>
    %c0_5 = arith.constant 0 : index
    %c0_6 = arith.constant 0 : index
    %6 = vector.load %arg5[%c0_5, %c0_6] : memref<16x128xf32, #tpu.memory_space<vmem>>, vector<16x128xf32>
    tpu.vector_store %arg5[%c0_5, %c0_6], %5 {strides = array<i32>} : memref<16x128xf32, #tpu.memory_space<vmem>>, vector<16x128xf32>,
    return
  }
  func.func @transform_0(%arg0: i32, %arg1: i32) -> (i32, i32) {
    %c0_i32 = arith.constant 0 : i32
    %c0_i32_0 = arith.constant 0 : i32
    return %arg0, %c0_i32 : i32, i32
  }
  func.func @transform_1(%arg0: i32, %arg1: i32) -> (i32, i32) {
    %c0_i32 = arith.constant 0 : i32
    %c0_i32_0 = arith.constant 0 : i32
    return %c0_i32, %arg1 : i32, i32
  }
  func.func @transform_2(%arg0: i32, %arg1: i32) -> (i32, i32) {
    %c0_i32 = arith.constant 0 : i32
    %c0_i32_0 = arith.constant 0 : i32
    return %c0_i32, %arg1 : i32, i32
  }
  func.func @transform_3(%arg0: i32, %arg1: i32) -> (i32, i32) {
    %c0_i32 = arith.constant 0 : i32
    return %arg0, %arg1 : i32, i32
  }
}

</mosaic_0001>

<llo_original>
// kernel: tpu_custom_call.1
$region0: #{tpu_custom_call.1}
  #allocation0 [shape = 'u32[]', space=smem, size = 0x4, offset = 0x4, fixed_abs, tag = 'smem constant byte address 0x4 - core index']
  #allocation1 [shape = 'u32[72,128]{1,0:T(1,128)}', space=vmem, size = 0x9000, scoped, tag = 'internal scratch']
  %s0 = inlined_call_operand.hbm [shape: f32[16,32], index: 0, kind: input, shape index: {}]
  %s1 = inlined_call_operand.hbm [shape: f32[32,128], index: 1, kind: input, shape index: {}]
  %s2 = inlined_call_operand.vmem [shape: f32[1,128], index: 2, kind: input, shape index: {}]
  %s3 = inlined_call_operand.hbm [shape: f32[16,128], index: 3, kind: output, shape index: {}]
  %s4 = sld [smem:[#allocation0]]
  $region30: #{tpu_custom_call.1} parent=0
    _
  %s6 = ssub.s32 1, %s4
  %s7 = scalar_select 0, %s6, %s4
  $region1: #{tpu_custom_call.1} parent=0
    #allocation2 [shape = 'u8[8192]{0}', space=vmem, size = 0x2000, scoped, tag = 'input window, operand 0, single buffered']
    #allocation3 [shape = 's32[1]{0}', space=sflag, size = 0x4, scoped, tag = 'scoped memory for tpu_custom_call.1']
    #allocation4 [shape = 's32[1]{0}', space=sflag, size = 0x4, scoped, tag = 'scoped memory for tpu_custom_call.1']
    #allocation5 [shape = 'u8[16384]{0}', space=vmem, size = 0x4000, scoped, tag = 'input window, operand 1, single buffered']
    #allocation6 [shape = 's32[1]{0}', space=sflag, size = 0x4, scoped, tag = 'scoped memory for tpu_custom_call.1']
    #allocation7 [shape = 'u8[8192]{0}', space=vmem, size = 0x2000, scoped, tag = 'output window, operand 0, single buffered']
    %8 = vsyncpa [#allocation3], 0
    %9 = vsyncpa [#allocation6], 0
    %10 = vsyncpa [#allocation4], 0
    // Predicated region
    $region2: #{tpu_custom_call.1} parent=1 // pred_check
      _
    $region3: #{tpu_custom_call.1} parent=1 // pred_check_branch
      %12 = sbr.rel (0) target = $region5
    $region4: #{tpu_custom_call.1} parent=1 // pred_region
      %14 = vsyncadd [#allocation3], 0
      %s15 = sshll.u32 %s0, 4
      %s16 = int_to_ptr.hbm [resolvable:$true] %s15
      %s17 = sshll.u32 [#allocation2], 4
      %s18 = int_to_ptr.vmem [resolvable:$true] %s17
      %23 = dma.hbm_to_vmem [thread:$0]  %s16, 256, %s18, [#allocation3], 128, 128, 8
    $region5: #{tpu_custom_call.1} parent=1 // pred_fallthru
      _
    // Predicated region
    $region6: #{tpu_custom_call.1} parent=1 // pred_check
      _
    $region7: #{tpu_custom_call.1} parent=1 // pred_check_branch
      %25 = sbr.rel (0) target = $region9
    $region8: #{tpu_custom_call.1} parent=1 // pred_region
      %27 = vsyncadd [#allocation6], 0
      %s28 = sshll.u32 %s1, 4
      %s29 = int_to_ptr.hbm [resolvable:$true] %s28
      %s30 = sshll.u32 [#allocation5], 4
      %s31 = int_to_ptr.vmem [resolvable:$true] %s30
      %36 = dma.hbm_to_vmem [thread:$0]  %s29, 512, %s31, [#allocation6], 128, 128, 8
    $region9: #{tpu_custom_call.1} parent=1 // pred_fallthru
      _
    // Predicated region
    $region10: #{tpu_custom_call.1} parent=1 // pred_check
      _
    $region11: #{tpu_custom_call.1} parent=1 // pred_check_branch
      %38 = sbr.rel (0) target = $region13
    $region12: #{tpu_custom_call.1} parent=1 // pred_region
      _
    $region13: #{tpu_custom_call.1} parent=1 // pred_fallthru
      _
    // Predicated region
    $region14: #{tpu_custom_call.1} parent=1 // pred_check
      _
    $region15: #{tpu_custom_call.1} parent=1 // pred_check_branch
      %40 = sbr.rel (0) target = $region17
    $region16: #{tpu_custom_call.1} parent=1 // pred_region
      %42 = dma.done [#allocation3], 256
    $region17: #{tpu_custom_call.1} parent=1 // pred_fallthru
      _
    // Predicated region
    $region18: #{tpu_custom_call.1} parent=1 // pred_check
      _
    $region19: #{tpu_custom_call.1} parent=1 // pred_check_branch
      %44 = sbr.rel (0) target = $region21
    $region20: #{tpu_custom_call.1} parent=1 // pred_region
      %46 = dma.done [#allocation6], 512
    $region21: #{tpu_custom_call.1} parent=1 // pred_fallthru
      _
    %v47 = vld [vmem:[#allocation2] sm:$0xff]
    %v48 = vld [vmem:[#allocation2 + $0x8] sm:$0xff]
    %v49 = vld [vmem:[#allocation5] sm:$0xff]
    %v50 = vld [vmem:[#allocation5 + $0x8] sm:$0xff]
    %v51 = vld [vmem:[#allocation5 + $0x10] sm:$0xff]
    %v52 = vld [vmem:[#allocation5 + $0x18] sm:$0xff]
    %v53 = vld [vmem:[%s2] sm:$0x1]
    %v55 = vperm.slane %v53, 0
    %vm57 = vcmask 261120
    %v59 = vsel %vm57, %v47, 0
    %v62 = vsel %vm57, %v48, 0
    %64 = vmatpush.msra.mxu0 0.0
    %65 = vmatpush.msra.mxu0 0.0
    %66 = vmatpush.msra.mxu0 0.0
    %67 = vmatpush.msra.mxu0 0.0
    %68 = vmatpush.msra.mxu0 0.0
    %69 = vmatpush.msra.mxu0 0.0
    %70 = vmatpush.msra.mxu0 0.0
    %71 = vmatpush.msra.mxu0 0.0
    %72 = vmatpush.msra.mxu0 0.0
    %73 = vmatpush.msra.mxu0 0.0
    %74 = vmatpush.msra.mxu0 0.0
    %75 = vmatpush.msra.mxu0 0.0
    %76 = vmatpush.msra.mxu0 %v52
    %77 = vmatpush.msra.mxu0 %v51
    %78 = vmatpush.msra.mxu0 %v50
    %79 = vmatpush.msra.mxu0 %v49
    %80 = vmatmul.f32.gmra.mxu0 %v59
    %v81 = vpop.f32.mrf.mxu0
    %v82 = vadd.f32 %v55, %v81
    %83 = vmatmul.f32.gmra.mxu0 %v62
    %v84 = vpop.f32.mrf.mxu0
    %v85 = vadd.f32 %v55, %v84
    %86 = vdwg.mxu0
    %87 = vst [vmem:[#allocation7] sm:$0xff] %v82
    %88 = vst [vmem:[#allocation7 + $0x8] sm:$0xff] %v85
    // Predicated region
    $region22: #{tpu_custom_call.1} parent=1 // pred_check
      _
    $region23: #{tpu_custom_call.1} parent=1 // pred_check_branch
      %90 = sbr.rel (0) target = $region25
    $region24: #{tpu_custom_call.1} parent=1 // pred_region
      %92 = vsyncadd [#allocation4], 0
      %s93 = sshll.u32 [#allocation7], 4
      %s94 = int_to_ptr.vmem [resolvable:$true] %s93
      %s95 = sshll.u32 %s3, 4
      %s96 = int_to_ptr.hbm [resolvable:$true] %s95
      %101 = dma.vmem_to_hbm [thread:$0]  %s94, 256, %s96, [#allocation4], 128, 128, 8
    $region25: #{tpu_custom_call.1} parent=1 // pred_fallthru
      _
    // Predicated region
    $region26: #{tpu_custom_call.1} parent=1 // pred_check
      _
    $region27: #{tpu_custom_call.1} parent=1 // pred_check_branch
      %103 = sbr.rel (0) target = $region29
    $region28: #{tpu_custom_call.1} parent=1 // pred_region
      %105 = dma.done [#allocation4], 256
    $region29: #{tpu_custom_call.1} parent=1 // pred_fallthru
      _
    %106 = vsyncpa [#allocation3], 1
    %107 = vsyncpa [#allocation6], 1
    %108 = vsyncpa [#allocation4], 1

</llo_original>
